<compile_context>
chip_gen: v5e
topology: v5e:2x2
jax: 0.10.0
libtpu: 0.0.40
codegen_flags: <defaults>
</compile_context>

<pallas_src>
import functools

import jax
import jax.numpy as jnp
from jax.experimental import pallas as pl
from jax.experimental.pallas import tpu as pltpu

CLIP_PARAM = 0.1

LANES = 128
SUBLANES = 8
# 2048 rows * 128 lanes: 1 MiB per f32 input block, >= 512 rows (~85%+ of the
# measured HBM roofline), small enough for every generation's default VMEM.
TARGET_TILE_ROWS = 2048


def _round_up(x, m):
    return ((x + m - 1) // m) * m


def _ppo_kernel(old_ref, new_ref, atarg_ref, out_ref, *, clip_lo, clip_hi,
                rows_valid, tile_m, needs_mask):
    # Upcast in-kernel; no-op for f32 inputs, halves HBM traffic for bf16.
    old = old_ref[...].astype(jnp.float32)
    new = new_ref[...].astype(jnp.float32)
    atarg = atarg_ref[...].astype(jnp.float32)

    # ratio = exp(new - old)
    ratio = jnp.exp(new - old)

    # min(ratio*A, clip(ratio, lo, hi)*A)
    #   == A * where(A >= 0, min(ratio, hi), max(ratio, lo))
    fused = jnp.where(
        atarg >= 0.0,
        jnp.minimum(ratio, jnp.float32(clip_hi)),
        jnp.maximum(ratio, jnp.float32(clip_lo)),
    )
    m = atarg * fused  # (tile_m, LANES) f32

    if needs_mask:
        # Grid does not divide the row count: rows >= rows_valid in the last
        # block hold unspecified data.  Select (not multiply) so NaN/Inf
        # garbage can never leak into the partial sum.
        row0 = pl.program_id(0) * tile_m
        row_idx = row0 + jax.lax.broadcasted_iota(jnp.int32, m.shape, 0)
        m = jnp.where(row_idx < rows_valid, m, jnp.float32(0.0))

    # Vreg-shaped partial sum: collapse groups of 8 sublanes with pure VPU adds.
    partial = m.reshape(tile_m // SUBLANES, SUBLANES, LANES).sum(axis=0)
    out_ref[...] = partial[None]  # (1, 8, 128)


def ppo_criterion(old_logprobs_agg, new_logprobs_agg, atarg, *, clip_param=CLIP_PARAM):
    """Returns the scalar PPO policy surrogate loss (float32)."""
    assert old_logprobs_agg.shape == new_logprobs_agg.shape == atarg.shape
    count = int(old_logprobs_agg.size)
    assert count > 0

    # Flatten only (free -- no HBM copy); keep the caller's dtype, cast in-kernel.
    old_f = old_logprobs_agg.reshape(-1)
    new_f = new_logprobs_agg.reshape(-1)
    atg_f = atarg.reshape(-1)

    rows = _round_up(count, LANES) // LANES  # cdiv(count, 128)
    lane_pad = rows * LANES - count
    if lane_pad:
        # Only when count is not a multiple of 128 (needed for the [rows, 128]
        # reshape).  Zero padding is exact: ratio == 1 and atarg == 0 there.
        # TODO(synk): this jnp.pad is still a full HBM copy; could be removed
        # via allow_input_fusion or a wrapper-side scalar tail.
        old_f = jnp.pad(old_f, (0, lane_pad))
        new_f = jnp.pad(new_f, (0, lane_pad))
        atg_f = jnp.pad(atg_f, (0, lane_pad))

    old2 = old_f.reshape(rows, LANES)
    new2 = new_f.reshape(rows, LANES)
    atg2 = atg_f.reshape(rows, LANES)

    # Tile rows: aim for >= ~4 grid steps (megacore balance on v7x) but cap the
    # block size; never round the arrays up -- the ragged last block is masked
    # inside the kernel instead of padded in HBM.
    tile_m = min(TARGET_TILE_ROWS, _round_up(max(rows // 4, SUBLANES), SUBLANES))
    num_tiles = (rows + tile_m - 1) // tile_m
    needs_mask = (rows % tile_m) != 0

    kernel = functools.partial(
        _ppo_kernel,
        clip_lo=1.0 - clip_param,
        clip_hi=1.0 + clip_param,
        rows_valid=rows,
        tile_m=tile_m,
        needs_mask=needs_mask,
    )

    in_spec = pl.BlockSpec((tile_m, LANES), lambda i: (i, 0))
    partials = pl.pallas_call(
        kernel,
        out_shape=jax.ShapeDtypeStruct((num_tiles, SUBLANES, LANES), jnp.float32),
        grid_spec=pltpu.PrefetchScalarGridSpec(
            num_scalar_prefetch=0,
            grid=(num_tiles,),
            in_specs=[in_spec, in_spec, in_spec],
            out_specs=pl.BlockSpec((1, SUBLANES, LANES), lambda i: (i, 0, 0)),
        ),
        compiler_params=pltpu.CompilerParams(
            dimension_semantics=("parallel",),
        ),
    )(old2, new2, atg2)

    # Tiny final reduce + negate + mean scale in the wrapper.
    return -jnp.sum(partials) * jnp.float32(1.0 / count)


def ppo_criterion_ref(old_lp, new_lp, atarg, *, clip_param=CLIP_PARAM):
    ratio = jnp.exp(new_lp.astype(jnp.float32) - old_lp.astype(jnp.float32))
    surr1 = ratio * atarg.astype(jnp.float32)
    surr2 = jnp.clip(ratio, 1.0 - clip_param, 1.0 + clip_param) * atarg.astype(
        jnp.float32
    )
    return -jnp.mean(jnp.minimum(surr1, surr2))


if __name__ == "__main__":
    key = jax.random.PRNGKey(0)
    keys = jax.random.split(key, 9)

    # Case 1: lane-aligned f32, [batch, seq] = [16, 128] -> 2 grid steps, no pad,
    # no mask.
    batch, seq = 16, 128
    old_lp = jax.random.normal(keys[0], (batch, seq), jnp.float32) * 0.5
    new_lp = old_lp + jax.random.normal(keys[1], (batch, seq), jnp.float32) * 0.1
    atarg = jax.random.normal(keys[2], (batch, seq), jnp.float32)

    loss = jax.block_until_ready(ppo_criterion(old_lp, new_lp, atarg))
    ref = ppo_criterion_ref(old_lp, new_lp, atarg)
    assert jnp.allclose(loss, ref, rtol=1e-5, atol=1e-5), (loss, ref)

    # Case 2: odd, non-lane-aligned shape -> exercises the lane-pad path and the
    # in-kernel ragged-row mask (rows=2 < tile_m=8).
    batch2, seq2 = 5, 37
    old2 = jax.random.normal(keys[3], (batch2, seq2), jnp.float32) * 0.5
    new2 = old2 + jax.random.normal(keys[4], (batch2, seq2), jnp.float32) * 0.1
    atg2 = jax.random.normal(keys[5], (batch2, seq2), jnp.float32)

    loss2 = jax.block_until_ready(ppo_criterion(old2, new2, atg2))
    ref2 = ppo_criterion_ref(old2, new2, atg2)
    assert jnp.allclose(loss2, ref2, rtol=1e-5, atol=1e-5), (loss2, ref2)

    # Case 3: bf16 inputs -> exercises the in-kernel upcast (no wrapper astype).
    batch3, seq3 = 4, 256
    old3 = (jax.random.normal(keys[6], (batch3, seq3), jnp.float32) * 0.5).astype(jnp.bfloat16)
    new3 = (old3.astype(jnp.float32)
            + jax.random.normal(keys[7], (batch3, seq3), jnp.float32) * 0.1).astype(jnp.bfloat16)
    atg3 = jax.random.normal(keys[8], (batch3, seq3), jnp.float32).astype(jnp.bfloat16)

    loss3 = jax.block_until_ready(ppo_criterion(old3, new3, atg3))
    ref3 = ppo_criterion_ref(old3, new3, atg3)
    assert jnp.allclose(loss3, ref3, rtol=1e-5, atol=1e-5), (loss3, ref3)

    print("KERNEL_OK")
</pallas_src>

<mosaic_0001>
module attributes {stable_mosaic.version = 11 : i64} {
  func.func @_ppo_kernel(%arg0: i32, %arg1: memref<8x128xf32, #tpu.memory_space<vmem>>, %arg2: memref<8x128xf32, #tpu.memory_space<vmem>>, %arg3: memref<8x128xf32, #tpu.memory_space<vmem>>, %arg4: memref<1x8x128xf32, #tpu.memory_space<vmem>>) attributes {dimension_semantics = [#tpu.dimension_semantics<parallel>], iteration_bounds = array<i64: 2>, scalar_prefetch = 0 : i64, scratch_operands = 0 : i64, tpu.core_type = #tpu.core_type<tc>, window_params = [{transform_indices = @transform_0, window_bounds = array<i64: 8, 128>}, {transform_indices = @transform_1, window_bounds = array<i64: 8, 128>}, {transform_indices = @transform_2, window_bounds = array<i64: 8, 128>}, {transform_indices = @transform_3, window_bounds = array<i64: 1, 8, 128>}]} {
    %c0 = arith.constant 0 : index
    %c0_0 = arith.constant 0 : index
    %0 = vector.load %arg1[%c0, %c0_0] : memref<8x128xf32, #tpu.memory_space<vmem>>, vector<8x128xf32>
    %c0_1 = arith.constant 0 : index
    %c0_2 = arith.constant 0 : index
    %1 = vector.load %arg2[%c0_1, %c0_2] : memref<8x128xf32, #tpu.memory_space<vmem>>, vector<8x128xf32>
    %c0_3 = arith.constant 0 : index
    %c0_4 = arith.constant 0 : index
    %2 = vector.load %arg3[%c0_3, %c0_4] : memref<8x128xf32, #tpu.memory_space<vmem>>, vector<8x128xf32>
    %3 = arith.subf %1, %0 : vector<8x128xf32>
    %4 = math.exp %3 : vector<8x128xf32>
    %cst = arith.constant 0.000000e+00 : f32
    %5 = vector.broadcast %cst : f32 to vector<8x128xf32>
    %6 = arith.cmpf oge, %2, %5 : vector<8x128xf32>
    %cst_5 = arith.constant 1.100000e+00 : f32
    %7 = vector.broadcast %cst_5 : f32 to vector<8x128xf32>
    %8 = arith.minimumf %4, %7 : vector<8x128xf32>
    %cst_6 = arith.constant 0.899999976 : f32
    %9 = vector.broadcast %cst_6 : f32 to vector<8x128xf32>
    %10 = arith.maximumf %4, %9 : vector<8x128xf32>
    %11 = arith.select %6, %8, %10 : vector<8x128xi1>, vector<8x128xf32>
    %12 = arith.mulf %2, %11 : vector<8x128xf32>
    %13 = vector.shape_cast %12 : vector<8x128xf32> to vector<1x8x128xf32>
    %cst_7 = arith.constant dense<0.000000e+00> : vector<8x128xf32>
    %14 = vector.multi_reduction <add>, %13, %cst_7 [0] : vector<1x8x128xf32> to vector<8x128xf32>
    %15 = vector.shape_cast %14 : vector<8x128xf32> to vector<1x8x128xf32>
    %c0_8 = arith.constant 0 : index
    %c0_9 = arith.constant 0 : index
    %c0_10 = arith.constant 0 : index
    %16 = vector.load %arg4[%c0_8, %c0_9, %c0_10] : memref<1x8x128xf32, #tpu.memory_space<vmem>>, vector<1x8x128xf32>
    tpu.vector_store %arg4[%c0_8, %c0_9, %c0_10], %15 {strides = array<i32>} : memref<1x8x128xf32, #tpu.memory_space<vmem>>, vector<1x8x128xf32>,
    return
  }
  func.func @transform_0(%arg0: i32) -> (i32, i32) {
    %c0_i32 = arith.constant 0 : i32
    %c0_i32_0 = arith.constant 0 : i32
    return %arg0, %c0_i32 : i32, i32
  }
  func.func @transform_1(%arg0: i32) -> (i32, i32) {
    %c0_i32 = arith.constant 0 : i32
    %c0_i32_0 = arith.constant 0 : i32
    return %arg0, %c0_i32 : i32, i32
  }
  func.func @transform_2(%arg0: i32) -> (i32, i32) {
    %c0_i32 = arith.constant 0 : i32
    %c0_i32_0 = arith.constant 0 : i32
    return %arg0, %c0_i32 : i32, i32
  }
  func.func @transform_3(%arg0: i32) -> (i32, i32, i32) {
    %c0_i32 = arith.constant 0 : i32
    %c0_i32_0 = arith.constant 0 : i32
    %c0_i32_1 = arith.constant 0 : i32
    return %arg0, %c0_i32, %c0_i32_0 : i32, i32, i32
  }
}

</mosaic_0001>

<llo_original>
// kernel: tpu_custom_call.1
$region0: #{tpu_custom_call.1}
  #allocation0 [shape = 'u32[]', space=smem, size = 0x4, offset = 0x4, fixed_abs, tag = 'smem constant byte address 0x4 - core index']
  #allocation1 [shape = 'u32[72,128]{1,0:T(1,128)}', space=vmem, size = 0x9000, scoped, tag = 'internal scratch']
  %s0 = inlined_call_operand.hbm [shape: f32[16,128], index: 0, kind: input, shape index: {}]
  %s1 = inlined_call_operand.hbm [shape: f32[16,128], index: 1, kind: input, shape index: {}]
  %s2 = inlined_call_operand.hbm [shape: f32[16,128], index: 2, kind: input, shape index: {}]
  %s3 = inlined_call_operand.hbm [shape: f32[2,8,128], index: 3, kind: output, shape index: {}]
  %s4 = sld [smem:[#allocation0]]
  $region57: #{tpu_custom_call.1} parent=0
    _
  %s6 = ssub.s32 1, %s4
  %s7 = scalar_select 0, %s6, %s4
  $region1: #{tpu_custom_call.1} parent=0
    #allocation2 [shape = 'u8[8192]{0}', space=vmem, size = 0x2000, scoped, tag = 'input window, operand 0']
    #allocation3 [shape = 's32[2]{0}', space=sflag, size = 0x8, scoped, tag = 'scoped memory for tpu_custom_call.1']
    #allocation4 [shape = 's32[2]{0}', space=sflag, size = 0x8, scoped, tag = 'scoped memory for tpu_custom_call.1']
    #allocation5 [shape = 'u8[8192]{0}', space=vmem, size = 0x2000, scoped, tag = 'input window, operand 1']
    #allocation6 [shape = 's32[2]{0}', space=sflag, size = 0x8, scoped, tag = 'scoped memory for tpu_custom_call.1']
    #allocation7 [shape = 'u8[8192]{0}', space=vmem, size = 0x2000, scoped, tag = 'input window, operand 2']
    #allocation8 [shape = 'u8[8192]{0}', space=vmem, size = 0x2000, scoped, tag = 'output window, operand 0']
    %8 = vsyncpa [#allocation3], 0
    %s9 = scalar_lea.sflag [#allocation3], 1
    %10 = vsyncpa %s9, 0
    %11 = vsyncpa [#allocation6], 0
    %s12 = scalar_lea.sflag [#allocation6], 1
    %13 = vsyncpa %s12, 0
    %14 = vsyncpa [#allocation4], 0
    %s15 = scalar_lea.sflag [#allocation4], 1
    %16 = vsyncpa %s15, 0
    loop: start=0, step=1, limit=4
    $region2: #{tpu_custom_call.1} parent=1 // loop_pre_header
      _
    $region3: #{tpu_custom_call.1} parent=1 // loop_header
      %s18 = sphi 0, %s22
      %p19 = scmp.ge.s32.totalorder %s18, 4
      %s28 = sphi 0, %s30
      %s31 = sphi 0, %s28
      %s32 = sphi 0, %s31
      %s48 = sphi 0, %s32
      %s54 = sphi 0, %s56
      %s57 = sphi 0, %s54
      %s58 = sphi 0, %s57
      %s74 = sphi 0, %s58
      %s80 = sphi 0, %s82
      %s83 = sphi 0, %s80
      %s84 = sphi 0, %s83
      %s100 = sphi 0, %s84
      %s106 = sphi 0, %s108
      %s109 = sphi 0, %s106
      %s110 = sphi 0, %s109
      %s126 = sphi 0, %s110
    $region4: #{tpu_custom_call.1} parent=1 // loop_header_branch
      %21 = sbr.rel (%p19) target = $region8
    $region5: #{tpu_custom_call.1} parent=1 // loop_body
      %s23 = ssub.s32 %s18, 1
      %s24 = ssub.s32 %s18, 2
      %s25 = sadd.s32 %s18, 1
      %s26 = ssub.s32 %s18, %s25
      %p27 = scmp.eq.s32.totalorder %s26, 0
      %s29 = sadd.s32 %s28, 1
      %s30 = scalar_select %p27, %s28, %s29
      %p33 = pneg %p27
      %p34 = scmp.eq.s32.totalorder %s18, 1
      %p35 = por %p33, %p34
      %p36 = scmp.ne.s32.totalorder %s28, %s31
      %p37 = scmp.eq.s32.totalorder %s18, 0
      %p38 = por %p36, %p37
      %p39 = scmp.ne.s32.totalorder %s28, %s31
      %p40 = scmp.eq.s32.totalorder %s23, 1
      %p41 = por %p39, %p40
      %p42 = scmp.ne.s32.totalorder %s31, %s32
      %p43 = scmp.eq.s32.totalorder %s23, 0
      %p44 = por %p42, %p43
      %p45 = scmp.ne.s32.totalorder %s31, %s32
      %p46 = scmp.eq.s32.totalorder %s24, 1
      %p47 = por %p45, %p46
      %p49 = scmp.ne.s32.totalorder %s32, %s48
      %p50 = scmp.eq.s32.totalorder %s24, 0
      %p51 = por %p49, %p50
      %s52 = ssub.s32 %s18, %s25
      %p53 = scmp.eq.s32.totalorder %s52, 0
      %s55 = sadd.s32 %s54, 1
      %s56 = scalar_select %p53, %s54, %s55
      %p59 = pneg %p53
      %p60 = scmp.eq.s32.totalorder %s18, 1
      %p61 = por %p59, %p60
      %p62 = scmp.ne.s32.totalorder %s54, %s57
      %p63 = scmp.eq.s32.totalorder %s18, 0
      %p64 = por %p62, %p63
      %p65 = scmp.ne.s32.totalorder %s54, %s57
      %p66 = scmp.eq.s32.totalorder %s23, 1
      %p67 = por %p65, %p66
      %p68 = scmp.ne.s32.totalorder %s57, %s58
      %p69 = scmp.eq.s32.totalorder %s23, 0
      %p70 = por %p68, %p69
      %p71 = scmp.ne.s32.totalorder %s57, %s58
      %p72 = scmp.eq.s32.totalorder %s24, 1
      %p73 = por %p71, %p72
      %p75 = scmp.ne.s32.totalorder %s58, %s74
      %p76 = scmp.eq.s32.totalorder %s24, 0
      %p77 = por %p75, %p76
      %s78 = ssub.s32 %s18, %s25
      %p79 = scmp.eq.s32.totalorder %s78, 0
      %s81 = sadd.s32 %s80, 1
      %s82 = scalar_select %p79, %s80, %s81
      %p85 = pneg %p79
      %p86 = scmp.eq.s32.totalorder %s18, 1
      %p87 = por %p85, %p86
      %p88 = scmp.ne.s32.totalorder %s80, %s83
      %p89 = scmp.eq.s32.totalorder %s18, 0
      %p90 = por %p88, %p89
      %p91 = scmp.ne.s32.totalorder %s80, %s83
      %p92 = scmp.eq.s32.totalorder %s23, 1
      %p93 = por %p91, %p92
      %p94 = scmp.ne.s32.totalorder %s83, %s84
      %p95 = scmp.eq.s32.totalorder %s23, 0
      %p96 = por %p94, %p95
      %p97 = scmp.ne.s32.totalorder %s83, %s84
      %p98 = scmp.eq.s32.totalorder %s24, 1
      %p99 = por %p97, %p98
      %p101 = scmp.ne.s32.totalorder %s84, %s100
      %p102 = scmp.eq.s32.totalorder %s24, 0
      %p103 = por %p101, %p102
      %s104 = ssub.s32 %s18, %s25
      %p105 = scmp.eq.s32.totalorder %s104, 0
      %s107 = sadd.s32 %s106, 1
      %s108 = scalar_select %p105, %s106, %s107
      %p111 = pneg %p105
      %p112 = scmp.eq.s32.totalorder %s18, 1
      %p113 = por %p111, %p112
      %p114 = scmp.ne.s32.totalorder %s106, %s109
      %p115 = scmp.eq.s32.totalorder %s18, 0
      %p116 = por %p114, %p115
      %p117 = scmp.ne.s32.totalorder %s106, %s109
      %p118 = scmp.eq.s32.totalorder %s23, 1
      %p119 = por %p117, %p118
      %p120 = scmp.ne.s32.totalorder %s109, %s110
      %p121 = scmp.eq.s32.totalorder %s23, 0
      %p122 = por %p120, %p121
      %p123 = scmp.ne.s32.totalorder %s109, %s110
      %p124 = scmp.eq.s32.totalorder %s24, 1
      %p125 = por %p123, %p124
      %p127 = scmp.ne.s32.totalorder %s110, %s126
      %p128 = scmp.eq.s32.totalorder %s24, 0
      %p129 = por %p127, %p128
      %p130 = scmp.le.s32.totalorder 1, %s18
      %p131 = scmp.lt.s32.totalorder %s18, 3
      %p132 = pnand %p130, %p131
      %p133 = pneg %p132
      // Predicated region
      $region9: #{tpu_custom_call.1} parent=5 // pred_check
        _
      $region10: #{tpu_custom_call.1} parent=5 // pred_check_branch
        %135 = sbr.rel (%p132) target = $region12
      $region11: #{tpu_custom_call.1} parent=5 // pred_region
        %s136 = ssub.s32 %s18, 1
      $region12: #{tpu_custom_call.1} parent=5 // pred_fallthru
        _
      %p137 = scmp.lt.s32.totalorder %s18, 2
      // Predicated region
      $region13: #{tpu_custom_call.1} parent=5 // pred_check
        %p138 = pneg %p137
      $region14: #{tpu_custom_call.1} parent=5 // pred_check_branch
        %140 = sbr.rel (%p138) target = $region16
      $region15: #{tpu_custom_call.1} parent=5 // pred_region
        // Predicated region
        $region17: #{tpu_custom_call.1} parent=15 // pred_check
          %p141 = pneg %p38
        $region18: #{tpu_custom_call.1} parent=15 // pred_check_branch
          %143 = sbr.rel (%p141) target = $region20
        $region19: #{tpu_custom_call.1} parent=15 // pred_region
          %s144 = sand.u32 %s28, 1
          %s145 = scalar_lea.sflag [#allocation3], %s144
          %s146 = sand.u32 %s28, 1
          %s147 = smul.addr %s146, 8
          %s148 = scalar_lea.vmem [#allocation2], %s147
          %150 = vsyncadd %s145, 0
          %s151 = smul.addr %s18, 8
          %s152 = scalar_lea.hbm %s0, %s151
          %s154 = sshll.u32 %s152, 4
          %s155 = int_to_ptr.hbm [resolvable:$true] %s154
          %s156 = sshll.u32 %s148, 4
          %s157 = int_to_ptr.vmem [resolvable:$true] %s156
          %159 = dma.hbm_to_vmem [thread:$0]  %s155, 128, %s157, %s145
        $region20: #{tpu_custom_call.1} parent=15 // pred_fallthru
          _
        // Predicated region
        $region21: #{tpu_custom_call.1} parent=15 // pred_check
          %p160 = pneg %p64
        $region22: #{tpu_custom_call.1} parent=15 // pred_check_branch
          %162 = sbr.rel (%p160) target = $region24
        $region23: #{tpu_custom_call.1} parent=15 // pred_region
          %s163 = sand.u32 %s18, 1
          %s164 = scalar_lea.sflag [#allocation6], %s163
          %s165 = sand.u32 %s54, 1
          %s166 = smul.addr %s165, 8
          %s167 = scalar_lea.vmem [#allocation5], %s166
          %169 = vsyncadd %s164, 0
          %s170 = smul.addr %s18, 8
          %s171 = scalar_lea.hbm %s1, %s170
          %s173 = sshll.u32 %s171, 4
          %s174 = int_to_ptr.hbm [resolvable:$true] %s173
          %s175 = sshll.u32 %s167, 4
          %s176 = int_to_ptr.vmem [resolvable:$true] %s175
          %178 = dma.hbm_to_vmem [thread:$0]  %s174, 128, %s176, %s164
        $region24: #{tpu_custom_call.1} parent=15 // pred_fallthru
          _
        // Predicated region
        $region25: #{tpu_custom_call.1} parent=15 // pred_check
          %p179 = pneg %p90
        $region26: #{tpu_custom_call.1} parent=15 // pred_check_branch
          %181 = sbr.rel (%p179) target = $region28
        $region27: #{tpu_custom_call.1} parent=15 // pred_region
          %s182 = sand.u32 %s18, 1
          %s183 = scalar_lea.sflag [#allocation6], %s182
          %s184 = sand.u32 %s80, 1
          %s185 = smul.addr %s184, 8
          %s186 = scalar_lea.vmem [#allocation7], %s185
          %188 = vsyncadd %s183, 0
          %s189 = smul.addr %s18, 8
          %s190 = scalar_lea.hbm %s2, %s189
          %s192 = sshll.u32 %s190, 4
          %s193 = int_to_ptr.hbm [resolvable:$true] %s192
          %s194 = sshll.u32 %s186, 4
          %s195 = int_to_ptr.vmem [resolvable:$true] %s194
          %197 = dma.hbm_to_vmem [thread:$0]  %s193, 128, %s195, %s183
        $region28: #{tpu_custom_call.1} parent=15 // pred_fallthru
          _
      $region16: #{tpu_custom_call.1} parent=5 // pred_fallthru
        _
      %p198 = scmp.le.s32.totalorder 1, %s18
      %p199 = scmp.lt.s32.totalorder %s18, 3
      %p200 = pnand %p198, %p199
      %p201 = pneg %p200
      // Predicated region
      $region29: #{tpu_custom_call.1} parent=5 // pred_check
        _
      $region30: #{tpu_custom_call.1} parent=5 // pred_check_branch
        %203 = sbr.rel (%p200) target = $region32
      $region31: #{tpu_custom_call.1} parent=5 // pred_region
        %s204 = ssub.s32 %s18, 1
        %s205 = sand.u32 %s31, 1
        %s206 = scalar_lea.sflag [#allocation3], %s205
        %s207 = sand.u32 %s31, 1
        %s208 = smul.addr %s207, 8
        %s209 = scalar_lea.vmem [#allocation2], %s208
        // Predicated region
        $region33: #{tpu_custom_call.1} parent=31 // pred_check
          %p210 = pneg %p44
        $region34: #{tpu_custom_call.1} parent=31 // pred_check_branch
          %212 = sbr.rel (%p210) target = $region36
        $region35: #{tpu_custom_call.1} parent=31 // pred_region
          %214 = dma.done %s206, 128
        $region36: #{tpu_custom_call.1} parent=31 // pred_fallthru
          _
        %s215 = sand.u32 %s23, 1
        %s216 = scalar_lea.sflag [#allocation6], %s215
        %s217 = sand.u32 %s57, 1
        %s218 = smul.addr %s217, 8
        %s219 = scalar_lea.vmem [#allocation5], %s218
        // Predicated region
        $region37: #{tpu_custom_call.1} parent=31 // pred_check
          %p220 = pneg %p70
        $region38: #{tpu_custom_call.1} parent=31 // pred_check_branch
          %222 = sbr.rel (%p220) target = $region40
        $region39: #{tpu_custom_call.1} parent=31 // pred_region
          %224 = dma.done %s216, 128
        $region40: #{tpu_custom_call.1} parent=31 // pred_fallthru
          _
        %s225 = sand.u32 %s23, 1
        %s226 = scalar_lea.sflag [#allocation6], %s225
        %s227 = sand.u32 %s83, 1
        %s228 = smul.addr %s227, 8
        %s229 = scalar_lea.vmem [#allocation7], %s228
        // Predicated region
        $region41: #{tpu_custom_call.1} parent=31 // pred_check
          %p230 = pneg %p96
        $region42: #{tpu_custom_call.1} parent=31 // pred_check_branch
          %232 = sbr.rel (%p230) target = $region44
        $region43: #{tpu_custom_call.1} parent=31 // pred_region
          %234 = dma.done %s226, 128
        $region44: #{tpu_custom_call.1} parent=31 // pred_fallthru
          _
        %s235 = sand.u32 %s31, 1
        %s236 = scalar_lea.sflag [#allocation3], %s235
        %s237 = sand.u32 %s31, 1
        %s238 = smul.addr %s237, 8
        %s239 = scalar_lea.vmem [#allocation2], %s238
        %p240 = pneg %p44
        %p241 = pneg %p41
        %s242 = sand.u32 %s23, 1
        %s243 = scalar_lea.sflag [#allocation6], %s242
        %s244 = sand.u32 %s57, 1
        %s245 = smul.addr %s244, 8
        %s246 = scalar_lea.vmem [#allocation5], %s245
        %p247 = pneg %p70
        %p248 = pneg %p67
        %s249 = sand.u32 %s23, 1
        %s250 = scalar_lea.sflag [#allocation6], %s249
        %s251 = sand.u32 %s83, 1
        %s252 = smul.addr %s251, 8
        %s253 = scalar_lea.vmem [#allocation7], %s252
        %p254 = pneg %p96
        %p255 = pneg %p93
        %p256 = pneg %p122
        %p257 = pneg %p119
        %s258 = sand.u32 %s109, 1
        %s259 = scalar_lea.sflag [#allocation4], %s258
        %s260 = sand.u32 %s109, 1
        %s261 = smul.addr %s260, 8
        %s262 = scalar_lea.vmem [#allocation8], %s261
        %v263 = vld [vmem:[%s209] sm:$0xff]
        %v264 = vld [vmem:[%s219] sm:$0xff]
        %v265 = vld [vmem:[%s229] sm:$0xff]
        %v266 = vsub.f32 %v264, %v263
        %v267 = vmul.f32 %v266, 1.442695
        %v268 = vpow.pop %v267
        %vm269 = vcmp.ge.f32.partialorder %v265, 0.0
        %v270 = vmin.f32 %v268, 1.1
        %v271 = vmax.f32 %v268, 0.9
        %v272 = vsel %vm269, %v270, %v271
        %v273 = vmul.f32 %v265, %v272
        %v274 = vadd.f32 %v273, 0.0
        %275 = vst [vmem:[%s262] sm:$0xff] %v274
        %s276 = sand.u32 %s109, 1
        %s277 = scalar_lea.sflag [#allocation4], %s276
        %s278 = sand.u32 %s109, 1
        %s279 = smul.addr %s278, 8
        %s280 = scalar_lea.vmem [#allocation8], %s279
        // Predicated region
        $region45: #{tpu_custom_call.1} parent=31 // pred_check
          %p281 = pneg %p119
        $region46: #{tpu_custom_call.1} parent=31 // pred_check_branch
          %283 = sbr.rel (%p281) target = $region48
        $region47: #{tpu_custom_call.1} parent=31 // pred_region
          %285 = vsyncadd %s277, 0
          %s286 = smul.addr %s23, 8
          %s287 = scalar_lea.hbm %s3, %s286
          %s289 = sshll.u32 %s280, 4
          %s290 = int_to_ptr.vmem [resolvable:$true] %s289
          %s291 = sshll.u32 %s287, 4
          %s292 = int_to_ptr.hbm [resolvable:$true] %s291
          %294 = dma.vmem_to_hbm [thread:$0]  %s290, 128, %s292, %s277
        $region48: #{tpu_custom_call.1} parent=31 // pred_fallthru
          _
      $region32: #{tpu_custom_call.1} parent=5 // pred_fallthru
        _
      %p295 = scmp.le.s32.totalorder 2, %s18
      // Predicated region
      $region49: #{tpu_custom_call.1} parent=5 // pred_check
        %p296 = pneg %p295
      $region50: #{tpu_custom_call.1} parent=5 // pred_check_branch
        %298 = sbr.rel (%p296) target = $region52
      $region51: #{tpu_custom_call.1} parent=5 // pred_region
        %s299 = ssub.s32 %s18, 2
        // Predicated region
        $region53: #{tpu_custom_call.1} parent=51 // pred_check
          %p300 = pneg %p125
        $region54: #{tpu_custom_call.1} parent=51 // pred_check_branch
          %302 = sbr.rel (%p300) target = $region56
        $region55: #{tpu_custom_call.1} parent=51 // pred_region
          %s303 = sand.u32 %s110, 1
          %s304 = scalar_lea.sflag [#allocation4], %s303
          %s305 = sand.u32 %s110, 1
          %s306 = smul.addr %s305, 8
          %s307 = scalar_lea.vmem [#allocation8], %s306
          %309 = dma.done %s304, 128
        $region56: #{tpu_custom_call.1} parent=51 // pred_fallthru
          _
      $region52: #{tpu_custom_call.1} parent=5 // pred_fallthru
        _
    $region6: #{tpu_custom_call.1} parent=1 // loop_footer
      %s22 = sadd.s32 1, %s18
    $region7: #{tpu_custom_call.1} parent=1 // loop_footer_branch
      %17 = sbr.rel target = $region3
    $region8: #{tpu_custom_call.1} parent=1 // loop_exit
      _
    %310 = vsyncpa [#allocation3], 1
    %s311 = scalar_lea.sflag [#allocation3], 1
    %312 = vsyncpa %s311, 1
    %313 = vsyncpa [#allocation6], 1
    %s314 = scalar_lea.sflag [#allocation6], 1
    %315 = vsyncpa %s314, 1
    %316 = vsyncpa [#allocation4], 1
    %s317 = scalar_lea.sflag [#allocation4], 1
    %318 = vsyncpa %s317, 1

</llo_original>
